<compile_context>
chip_gen: v7x
topology: tpu7x:2x2x1
jax: 0.10.0
libtpu: 0.0.40
codegen_flags: <defaults>
</compile_context>

<pallas_src>
import functools

import jax
import jax.numpy as jnp
from jax.experimental import pallas as pl
from jax.experimental.pallas import tpu as pltpu


def _round_up(n, m):
    return ((n + m - 1) // m) * m


# -----------------------------------------------------------------------------
# One-time device / capability probes (cached in module globals).
# -----------------------------------------------------------------------------
_NUM_TC = None
_VMEM_CAP = None
_BUFFERED1_OK = None


def _num_tensorcores():
    """2 TensorCores on v7x (balanced megacore split), else 1 (v5e/v6e)."""
    global _NUM_TC
    if _NUM_TC is None:
        try:
            kind = jax.devices()[0].device_kind.lower()
        except Exception:
            kind = ""
        _NUM_TC = 2 if "v7" in kind else 1
    return _NUM_TC


def _vmem_capacity_bytes():
    global _VMEM_CAP
    if _VMEM_CAP is None:
        try:
            _VMEM_CAP = int(pltpu.get_tpu_info().vmem_capacity_bytes)
        except Exception:
            _VMEM_CAP = 64 * 1024 * 1024  # v7x-conservative fallback
    return _VMEM_CAP


def _buffered1_supported():
    """One-time probe: can this jax build single-buffer a constant-index block?"""
    global _BUFFERED1_OK
    if _BUFFERED1_OK is None:
        try:
            def _probe(x_ref, o_ref):
                o_ref[...] = x_ref[...] * 2.0

            call = pl.pallas_call(
                _probe,
                out_shape=jax.ShapeDtypeStruct((16, 128), jnp.float32),
                grid_spec=pl.GridSpec(
                    grid=(2,),
                    in_specs=[pl.BlockSpec((8, 128), lambda i: (0, 0),
                                           pipeline_mode=pl.Buffered(1))],
                    out_specs=pl.BlockSpec((8, 128), lambda i: (i, 0)),
                ),
            )
            jax.block_until_ready(call(jnp.ones((8, 128), jnp.float32)))
            _BUFFERED1_OK = True
        except Exception:
            # Capability probe only (runs once per process); any failure simply
            # means we fall back to default double buffering of the tiny params.
            _BUFFERED1_OK = False
    return _BUFFERED1_OK


# -----------------------------------------------------------------------------
# Kernel
# -----------------------------------------------------------------------------
def _mlp_kernel(num_layers, mxu_dtype, x_ref, *refs):
    """refs = (w0, b0, w1, b1, ..., w_{L-1}, b_{L-1}, out_ref).

    Hidden layers: Linear + ReLU; final layer: Linear + Identity (matches
    build_mlp).  Matmuls run on the MXU in `mxu_dtype` with f32 accumulation
    (preferred_element_type); the x cast, bias add and ReLU run on the VPU.
    """
    out_ref = refs[-1]
    params = refs[:-1]

    h = x_ref[...].astype(mxu_dtype)          # x streamed as f32, free VPU cast
    for li in range(num_layers):
        w = params[2 * li][...]               # (fan_in, fan_out), resident
        b = params[2 * li + 1][...]           # (1, fan_out) f32, broadcasts
        acc = jnp.dot(h, w, preferred_element_type=jnp.float32) + b
        if li < num_layers - 1:
            h = jnp.maximum(acc, 0.0).astype(mxu_dtype)
        else:
            out_ref[...] = acc.astype(out_ref.dtype)


# -----------------------------------------------------------------------------
# Cached pallas_call builder (one build per static config, reused across calls).
# -----------------------------------------------------------------------------
@functools.lru_cache(maxsize=None)
def _build_decoder_call(n_rows, tile_m, node_in, node_out, num_layers,
                        param_shapes, mxu_dtype_name, out_dtype_name,
                        vmem_limit_bytes, flops, bytes_accessed,
                        single_buffer_params):
    def const_spec(shape):
        if single_buffer_params:
            # Constant index_map: the block never changes across the grid, so a
            # single resident VMEM buffer suffices (no double-buffer copy).
            return pl.BlockSpec(shape, lambda i: (0, 0),
                                pipeline_mode=pl.Buffered(1))
        return pl.BlockSpec(shape, lambda i: (0, 0))

    in_specs = [pl.BlockSpec((tile_m, node_in), lambda i: (i, 0))]
    for shape in param_shapes:
        in_specs.append(const_spec(shape))
    out_specs = pl.BlockSpec((tile_m, node_out), lambda i: (i, 0))

    return pl.pallas_call(
        functools.partial(_mlp_kernel, num_layers, jnp.dtype(mxu_dtype_name)),
        out_shape=jax.ShapeDtypeStruct((n_rows, node_out),
                                       jnp.dtype(out_dtype_name)),
        grid_spec=pl.GridSpec(
            grid=(pl.cdiv(n_rows, tile_m),),   # ragged last block is masked
            in_specs=in_specs,
            out_specs=out_specs,
        ),
        compiler_params=pltpu.CompilerParams(
            dimension_semantics=("parallel",),
            vmem_limit_bytes=vmem_limit_bytes),
        cost_estimate=pl.CostEstimate(flops=flops, transcendentals=0,
                                      bytes_accessed=bytes_accessed),
    )


# -----------------------------------------------------------------------------
# Host-side wrapper
# -----------------------------------------------------------------------------
def prepare_decoder_params(weights, biases, *, use_bf16=True):
    """One-time prep: weights cast to the MXU dtype, biases to (1, F) float32.

    Call once and reuse the result across decoder_forward calls so no per-call
    casting/reshaping ops are dispatched.
    """
    mxu_dtype = jnp.dtype(jnp.bfloat16) if use_bf16 else jnp.dtype(jnp.float32)
    weights_c = [jnp.asarray(w, mxu_dtype) for w in weights]
    biases_2d = [jnp.asarray(b, jnp.float32).reshape(1, -1) for b in biases]
    return weights_c, biases_2d


def _pick_tile_m(n_rows, num_cores):
    cap = 8192  # ~a few MiB of VMEM per tile at decoder widths; fine everywhere
    if num_cores >= 2 and n_rows >= 512:
        # v7x: exactly two balanced grid steps so both TensorCores get work.
        tile = _round_up(pl.cdiv(n_rows, num_cores), 16)
    else:
        # v5e/v6e (1 TC): one big tile; per-step overhead dominates otherwise.
        tile = _round_up(n_rows, 16)
    return max(16, min(tile, cap))


def decoder_forward(x, weights, biases, *, tile_m=None, use_bf16=True,
                    out_dtype=None):
    """Decoder forward pass with a fused Pallas kernel.

    x: (N, node_in) float32
    weights[i]: (fan_in_i, fan_out_i)  (i.e. torch W^T)
    biases[i]:  (fan_out_i,) or (1, fan_out_i)
    Pass prepare_decoder_params() output to avoid any per-call casts.
    """
    n_rows, node_in = x.shape
    num_layers = len(weights)
    node_out = weights[-1].shape[1]
    out_dtype = jnp.dtype(x.dtype if out_dtype is None else out_dtype)

    mxu_dtype = jnp.dtype(jnp.bfloat16) if use_bf16 else jnp.dtype(jnp.float32)
    weights_c = [w if w.dtype == mxu_dtype else w.astype(mxu_dtype)
                 for w in weights]
    biases_2d = [b if (b.ndim == 2 and b.dtype == jnp.dtype(jnp.float32))
                 else jnp.asarray(b, jnp.float32).reshape(1, -1)
                 for b in biases]
    flat_params = []
    for w, b in zip(weights_c, biases_2d):
        flat_params += [w, b]

    if tile_m is None:
        tile_m = _pick_tile_m(int(n_rows), _num_tensorcores())
    else:
        tile_m = max(16, _round_up(int(tile_m), 16))

    single_buffer = _buffered1_supported()

    # --- cost estimate + generation-aware VMEM budget -------------------------
    param_bytes = sum(int(a.size) * a.dtype.itemsize for a in flat_params)
    flops = 2 * int(n_rows) * sum(w.shape[0] * w.shape[1] for w in weights_c)
    bytes_accessed = (int(n_rows) * node_in * x.dtype.itemsize + param_bytes
                      + int(n_rows) * node_out * out_dtype.itemsize)

    max_width = max(max(w.shape[1] for w in weights_c), node_in)
    x_tile_bytes = tile_m * node_in * x.dtype.itemsize
    out_tile_bytes = tile_m * node_out * out_dtype.itemsize
    act_bytes = 2 * tile_m * max_width * 4            # f32 activation headroom
    vmem_needed = ((param_bytes if single_buffer else 2 * param_bytes)
                   + 2 * (x_tile_bytes + out_tile_bytes) + act_bytes)
    vmem_limit = None
    if vmem_needed > 16 * 1024 * 1024:                # v5e scoped-VMEM default
        vmem_limit = min(int(vmem_needed * 3 // 2),
                         _vmem_capacity_bytes() - 8 * 1024 * 1024)

    call = _build_decoder_call(
        int(n_rows), int(tile_m), int(node_in), int(node_out), int(num_layers),
        tuple(tuple(int(d) for d in a.shape) for a in flat_params),
        mxu_dtype.name, out_dtype.name,
        vmem_limit, int(flops), int(bytes_accessed), bool(single_buffer))
    return call(x, *flat_params)


# -----------------------------------------------------------------------------
# Reference + init (PyTorch nn.Linear-style)
# -----------------------------------------------------------------------------
def init_decoder_params(key, node_in, node_out, mlp_num_layers, mlp_hidden_dim):
    """torch.nn.Linear init: U(-1/sqrt(fan_in), 1/sqrt(fan_in)); W stored (fan_in, fan_out)."""
    sizes = [node_in] + [mlp_hidden_dim] * mlp_num_layers + [node_out]
    weights, biases = [], []
    for i in range(len(sizes) - 1):
        fan_in, fan_out = sizes[i], sizes[i + 1]
        key, kw, kb = jax.random.split(key, 3)
        bound = 1.0 / float(fan_in) ** 0.5
        weights.append(
            jax.random.uniform(kw, (fan_in, fan_out), jnp.float32, -bound, bound))
        biases.append(
            jax.random.uniform(kb, (fan_out,), jnp.float32, -bound, bound))
    return weights, biases


def decoder_reference(x, weights, biases):
    h = x
    num_layers = len(weights)
    for li, (w, b) in enumerate(zip(weights, biases)):
        h = jnp.dot(h, w, precision=jax.lax.Precision.HIGHEST) \
            + jnp.asarray(b).reshape(1, -1)
        if li < num_layers - 1:
            h = jnp.maximum(h, 0.0)
    return h


if __name__ == "__main__":
    node_in, node_out = 32, 16
    mlp_num_layers, mlp_hidden_dim = 2, 32

    key = jax.random.PRNGKey(0)
    key, kx1, kx2 = jax.random.split(key, 3)
    weights, biases = init_decoder_params(
        key, node_in, node_out, mlp_num_layers, mlp_hidden_dim)

    # One-time (hoisted) parameter preparation.
    w_bf16, b2d = prepare_decoder_params(weights, biases, use_bf16=True)
    w_f32, _ = prepare_decoder_params(weights, biases, use_bf16=False)

    # Case 1: ragged N (130) -> single masked tile, bf16 MXU path.
    N1 = 130
    x1 = jax.random.normal(kx1, (N1, node_in), dtype=jnp.float32)
    ref1 = decoder_reference(x1, weights, biases)
    out1 = jax.block_until_ready(decoder_forward(x1, w_bf16, b2d))
    assert out1.shape == (N1, node_out)
    assert jnp.allclose(out1, ref1, atol=5e-2, rtol=5e-2), "bf16 mismatch (case 1)"

    # Case 1b: f32 MXU operands (tighter tolerance than the bf16 path).
    out1f = jax.block_until_ready(decoder_forward(x1, w_f32, b2d, use_bf16=False))
    assert jnp.allclose(out1f, ref1, atol=5e-3, rtol=5e-3), "f32 mismatch (case 1b)"

    # Case 1c: forced multi-step grid (tile_m=64 -> 3 steps) with ragged last block.
    out1m = jax.block_until_ready(decoder_forward(x1, w_bf16, b2d, tile_m=64))
    assert jnp.allclose(out1m, ref1, atol=5e-2, rtol=5e-2), "bf16 mismatch (case 1c)"

    # Case 2: N=2048 -> one big tile on v5e/v6e, two balanced tiles on v7x.
    N2 = 2048
    x2 = jax.random.normal(kx2, (N2, node_in), dtype=jnp.float32)
    ref2 = decoder_reference(x2, weights, biases)
    out2 = jax.block_until_ready(decoder_forward(x2, w_bf16, b2d))
    assert out2.shape == (N2, node_out)
    assert jnp.allclose(out2, ref2, atol=5e-2, rtol=5e-2), "bf16 mismatch (case 2)"

    print("KERNEL_OK")
</pallas_src>

<mosaic_0001>
module attributes {stable_mosaic.version = 11 : i64} {
  func.func @_probe(%arg0: i32, %arg1: memref<8x128xf32, #tpu.memory_space<vmem>>, %arg2: memref<8x128xf32, #tpu.memory_space<vmem>>) attributes {dimension_semantics = [#tpu.dimension_semantics<arbitrary>], iteration_bounds = array<i64: 2>, scalar_prefetch = 0 : i64, scratch_operands = 0 : i64, tpu.core_type = #tpu.core_type<tc>, window_params = [{pipeline_mode = #tpu.pipeline_mode<synchronous>, transform_indices = @transform_0, window_bounds = array<i64: 8, 128>}, {transform_indices = @transform_1, window_bounds = array<i64: 8, 128>}]} {
    %c0 = arith.constant 0 : index
    %c0_0 = arith.constant 0 : index
    %0 = vector.load %arg1[%c0, %c0_0] : memref<8x128xf32, #tpu.memory_space<vmem>>, vector<8x128xf32>
    %cst = arith.constant 2.000000e+00 : f32
    %1 = vector.broadcast %cst : f32 to vector<8x128xf32>
    %2 = arith.mulf %0, %1 : vector<8x128xf32>
    %c0_1 = arith.constant 0 : index
    %c0_2 = arith.constant 0 : index
    %3 = vector.load %arg2[%c0_1, %c0_2] : memref<8x128xf32, #tpu.memory_space<vmem>>, vector<8x128xf32>
    tpu.vector_store %arg2[%c0_1, %c0_2], %2 {strides = array<i32>} : memref<8x128xf32, #tpu.memory_space<vmem>>, vector<8x128xf32>,
    return
  }
  func.func @transform_0(%arg0: i32) -> (i32, i32) {
    %c0_i32 = arith.constant 0 : i32
    %c0_i32_0 = arith.constant 0 : i32
    %c0_i32_1 = arith.constant 0 : i32
    return %c0_i32, %c0_i32_0 : i32, i32
  }
  func.func @transform_1(%arg0: i32) -> (i32, i32) {
    %c0_i32 = arith.constant 0 : i32
    %c0_i32_0 = arith.constant 0 : i32
    return %arg0, %c0_i32 : i32, i32
  }
}

module attributes {stable_mosaic.version = 11 : i64} {
  func.func @_mlp_kernel(%arg0: i32, %arg1: memref<144x32xf32, #tpu.memory_space<vmem>>, %arg2: memref<32x32xbf16, #tpu.memory_space<vmem>>, %arg3: memref<1x32xf32, #tpu.memory_space<vmem>>, %arg4: memref<32x32xbf16, #tpu.memory_space<vmem>>, %arg5: memref<1x32xf32, #tpu.memory_space<vmem>>, %arg6: memref<32x16xbf16, #tpu.memory_space<vmem>>, %arg7: memref<1x16xf32, #tpu.memory_space<vmem>>, %arg8: memref<144x16xf32, #tpu.memory_space<vmem>>) attributes {dimension_semantics = [#tpu.dimension_semantics<parallel>], iteration_bounds = array<i64: 1>, scalar_prefetch = 0 : i64, scratch_operands = 0 : i64, tpu.core_type = #tpu.core_type<tc>, window_params = [{transform_indices = @transform_0, window_bounds = array<i64: 144, 32>}, {pipeline_mode = #tpu.pipeline_mode<synchronous>, transform_indices = @transform_1, window_bounds = array<i64: 32, 32>}, {pipeline_mode = #tpu.pipeline_mode<synchronous>, transform_indices = @transform_2, window_bounds = array<i64: 1, 32>}, {pipeline_mode = #tpu.pipeline_mode<synchronous>, transform_indices = @transform_3, window_bounds = array<i64: 32, 32>}, {pipeline_mode = #tpu.pipeline_mode<synchronous>, transform_indices = @transform_4, window_bounds = array<i64: 1, 32>}, {pipeline_mode = #tpu.pipeline_mode<synchronous>, transform_indices = @transform_5, window_bounds = array<i64: 32, 16>}, {pipeline_mode = #tpu.pipeline_mode<synchronous>, transform_indices = @transform_6, window_bounds = array<i64: 1, 16>}, {transform_indices = @transform_7, window_bounds = array<i64: 144, 16>}]} {
    %c0 = arith.constant 0 : index
    %c0_0 = arith.constant 0 : index
    %0 = vector.load %arg1[%c0, %c0_0] : memref<144x32xf32, #tpu.memory_space<vmem>>, vector<144x32xf32>
    %1 = arith.truncf %0 : vector<144x32xf32> to vector<144x32xbf16>
    %c0_1 = arith.constant 0 : index
    %c0_2 = arith.constant 0 : index
    %2 = vector.load %arg2[%c0_1, %c0_2] : memref<32x32xbf16, #tpu.memory_space<vmem>>, vector<32x32xbf16>
    %c0_3 = arith.constant 0 : index
    %c0_4 = arith.constant 0 : index
    %3 = vector.load %arg3[%c0_3, %c0_4] : memref<1x32xf32, #tpu.memory_space<vmem>>, vector<1x32xf32>
    %cst = arith.constant dense<0.000000e+00> : vector<144x32xf32>
    %4 = tpu.matmul %1, %2, %cst {dimension_numbers = #tpu.dot_dimension_numbers<[1], [0], [0], [1], [0, 0, 1, 1], [], []>} : vector<144x32xbf16>, vector<32x32xbf16>, vector<144x32xf32> -> vector<144x32xf32>
    %5 = vector.broadcast %3 : vector<1x32xf32> to vector<144x32xf32>
    %6 = arith.addf %4, %5 : vector<144x32xf32>
    %cst_5 = arith.constant 0.000000e+00 : f32
    %7 = vector.broadcast %cst_5 : f32 to vector<144x32xf32>
    %8 = arith.maximumf %6, %7 : vector<144x32xf32>
    %9 = arith.truncf %8 : vector<144x32xf32> to vector<144x32xbf16>
    %c0_6 = arith.constant 0 : index
    %c0_7 = arith.constant 0 : index
    %10 = vector.load %arg4[%c0_6, %c0_7] : memref<32x32xbf16, #tpu.memory_space<vmem>>, vector<32x32xbf16>
    %c0_8 = arith.constant 0 : index
    %c0_9 = arith.constant 0 : index
    %11 = vector.load %arg5[%c0_8, %c0_9] : memref<1x32xf32, #tpu.memory_space<vmem>>, vector<1x32xf32>
    %cst_10 = arith.constant dense<0.000000e+00> : vector<144x32xf32>
    %12 = tpu.matmul %9, %10, %cst_10 {dimension_numbers = #tpu.dot_dimension_numbers<[1], [0], [0], [1], [0, 0, 1, 1], [], []>} : vector<144x32xbf16>, vector<32x32xbf16>, vector<144x32xf32> -> vector<144x32xf32>
    %13 = vector.broadcast %11 : vector<1x32xf32> to vector<144x32xf32>
    %14 = arith.addf %12, %13 : vector<144x32xf32>
    %cst_11 = arith.constant 0.000000e+00 : f32
    %15 = vector.broadcast %cst_11 : f32 to vector<144x32xf32>
    %16 = arith.maximumf %14, %15 : vector<144x32xf32>
    %17 = arith.truncf %16 : vector<144x32xf32> to vector<144x32xbf16>
    %c0_12 = arith.constant 0 : index
    %c0_13 = arith.constant 0 : index
    %18 = vector.load %arg6[%c0_12, %c0_13] : memref<32x16xbf16, #tpu.memory_space<vmem>>, vector<32x16xbf16>
    %c0_14 = arith.constant 0 : index
    %c0_15 = arith.constant 0 : index
    %19 = vector.load %arg7[%c0_14, %c0_15] : memref<1x16xf32, #tpu.memory_space<vmem>>, vector<1x16xf32>
    %cst_16 = arith.constant dense<0.000000e+00> : vector<144x16xf32>
    %20 = tpu.matmul %17, %18, %cst_16 {dimension_numbers = #tpu.dot_dimension_numbers<[1], [0], [0], [1], [0, 0, 1, 1], [], []>} : vector<144x32xbf16>, vector<32x16xbf16>, vector<144x16xf32> -> vector<144x16xf32>
    %21 = vector.broadcast %19 : vector<1x16xf32> to vector<144x16xf32>
    %22 = arith.addf %20, %21 : vector<144x16xf32>
    %c0_17 = arith.constant 0 : index
    %c0_18 = arith.constant 0 : index
    %23 = vector.load %arg8[%c0_17, %c0_18] : memref<144x16xf32, #tpu.memory_space<vmem>>, vector<144x16xf32>
    tpu.vector_store %arg8[%c0_17, %c0_18], %22 {strides = array<i32>} : memref<144x16xf32, #tpu.memory_space<vmem>>, vector<144x16xf32>,
    return
  }
  func.func @transform_0(%arg0: i32) -> (i32, i32) {
    %c0_i32 = arith.constant 0 : i32
    %c0_i32_0 = arith.constant 0 : i32
    return %arg0, %c0_i32 : i32, i32
  }
  func.func @transform_1(%arg0: i32) -> (i32, i32) {
    %c0_i32 = arith.constant 0 : i32
    %c0_i32_0 = arith.constant 0 : i32
    %c0_i32_1 = arith.constant 0 : i32
    return %c0_i32, %c0_i32_0 : i32, i32
  }
  func.func @transform_2(%arg0: i32) -> (i32, i32) {
    %c0_i32 = arith.constant 0 : i32
    %c0_i32_0 = arith.constant 0 : i32
    %c0_i32_1 = arith.constant 0 : i32
    return %c0_i32, %c0_i32_0 : i32, i32
  }
  func.func @transform_3(%arg0: i32) -> (i32, i32) {
    %c0_i32 = arith.constant 0 : i32
    %c0_i32_0 = arith.constant 0 : i32
    %c0_i32_1 = arith.constant 0 : i32
    return %c0_i32, %c0_i32_0 : i32, i32
  }
  func.func @transform_4(%arg0: i32) -> (i32, i32) {
    %c0_i32 = arith.constant 0 : i32
    %c0_i32_0 = arith.constant 0 : i32
    %c0_i32_1 = arith.constant 0 : i32
    return %c0_i32, %c0_i32_0 : i32, i32
  }
  func.func @transform_5(%arg0: i32) -> (i32, i32) {
    %c0_i32 = arith.constant 0 : i32
    %c0_i32_0 = arith.constant 0 : i32
    %c0_i32_1 = arith.constant 0 : i32
    return %c0_i32, %c0_i32_0 : i32, i32
  }
  func.func @transform_6(%arg0: i32) -> (i32, i32) {
    %c0_i32 = arith.constant 0 : i32
    %c0_i32_0 = arith.constant 0 : i32
    %c0_i32_1 = arith.constant 0 : i32
    return %c0_i32, %c0_i32_0 : i32, i32
  }
  func.func @transform_7(%arg0: i32) -> (i32, i32) {
    %c0_i32 = arith.constant 0 : i32
    %c0_i32_0 = arith.constant 0 : i32
    return %arg0, %c0_i32 : i32, i32
  }
}

</mosaic_0001>

<llo_original>
// kernel: tpu_custom_call.1
$region0: #{tpu_custom_call.1}
  #allocation0 [shape = 'u32[]', space=smem, size = 0x4, offset = 0x4, fixed_abs, tag = 'smem constant byte address 0x4 - core index']
  #allocation1 [shape = 'u32[144,128]{1,0:T(1,128)}', space=vmem, size = 0x12000, scoped, tag = 'internal scratch']
  %s0 = inlined_call_operand.hbm [shape: f32[8,128], index: 0, kind: input, shape index: {}]
  %s1 = inlined_call_operand.hbm [shape: f32[16,128], index: 1, kind: output, shape index: {}]
  %s2 = sld [smem:[#allocation0]]
  $region41: #{tpu_custom_call.1} parent=0
    _
  %s4 = ssub.s32 1, %s2
  %s5 = scalar_select 0, %s4, %s2
  $region1: #{tpu_custom_call.1} parent=0
    #allocation2 [shape = 'u8[4096]{0}', space=vmem, size = 0x1000, scoped, tag = 'input window, operand 0, single buffered']
    #allocation3 [shape = 's32[2]{0}', space=sflag, size = 0x8, scoped, tag = 'scoped memory for tpu_custom_call.1']
    #allocation4 [shape = 's32[2]{0}', space=sflag, size = 0x8, scoped, tag = 'scoped memory for tpu_custom_call.1']
    #allocation5 [shape = 'u8[8192]{0}', space=vmem, size = 0x2000, scoped, tag = 'output window, operand 0']
    %6 = vsyncpa [#allocation3], 0
    %7 = vsyncpa [#allocation4], 0
    %s8 = scalar_lea.sflag [#allocation4], 1
    %9 = vsyncpa %s8, 0
    loop: start=0, step=1, limit=4
    $region2: #{tpu_custom_call.1} parent=1 // loop_pre_header
      _
    $region3: #{tpu_custom_call.1} parent=1 // loop_header
      %s11 = sphi 0, %s15
      %p12 = scmp.ge.s32.totalorder %s11, 4
      %s19 = sphi 0, %s19
      %s21 = sphi 0, %s19
      %s22 = sphi 0, %s21
      %s36 = sphi 0, %s22
      %s42 = sphi 0, %s44
      %s45 = sphi 0, %s42
      %s46 = sphi 0, %s45
      %s62 = sphi 0, %s46
    $region4: #{tpu_custom_call.1} parent=1 // loop_header_branch
      %14 = sbr.rel (%p12) target = $region8
    $region5: #{tpu_custom_call.1} parent=1 // loop_body
      %s16 = ssub.s32 %s11, 1
      %s17 = ssub.s32 %s11, 2
      %s18 = sadd.s32 %s11, 1
      %s20 = sadd.s32 %s19, 1
      %p23 = scmp.eq.s32.totalorder %s11, 1
      %p24 = scmp.ne.s32.totalorder %s19, %s21
      %p25 = scmp.eq.s32.totalorder %s11, 0
      %p26 = por %p24, %p25
      %p27 = scmp.ne.s32.totalorder %s19, %s21
      %p28 = scmp.eq.s32.totalorder %s16, 1
      %p29 = por %p27, %p28
      %p30 = scmp.ne.s32.totalorder %s21, %s22
      %p31 = scmp.eq.s32.totalorder %s16, 0
      %p32 = por %p30, %p31
      %p33 = scmp.ne.s32.totalorder %s21, %s22
      %p34 = scmp.eq.s32.totalorder %s17, 1
      %p35 = por %p33, %p34
      %p37 = scmp.ne.s32.totalorder %s22, %s36
      %p38 = scmp.eq.s32.totalorder %s17, 0
      %p39 = por %p37, %p38
      %s40 = ssub.s32 %s11, %s18
      %p41 = scmp.eq.s32.totalorder %s40, 0
      %s43 = sadd.s32 %s42, 1
      %s44 = scalar_select %p41, %s42, %s43
      %p47 = pneg %p41
      %p48 = scmp.eq.s32.totalorder %s11, 1
      %p49 = por %p47, %p48
      %p50 = scmp.ne.s32.totalorder %s42, %s45
      %p51 = scmp.eq.s32.totalorder %s11, 0
      %p52 = por %p50, %p51
      %p53 = scmp.ne.s32.totalorder %s42, %s45
      %p54 = scmp.eq.s32.totalorder %s16, 1
      %p55 = por %p53, %p54
      %p56 = scmp.ne.s32.totalorder %s45, %s46
      %p57 = scmp.eq.s32.totalorder %s16, 0
      %p58 = por %p56, %p57
      %p59 = scmp.ne.s32.totalorder %s45, %s46
      %p60 = scmp.eq.s32.totalorder %s17, 1
      %p61 = por %p59, %p60
      %p63 = scmp.ne.s32.totalorder %s46, %s62
      %p64 = scmp.eq.s32.totalorder %s17, 0
      %p65 = por %p63, %p64
      %p66 = scmp.le.s32.totalorder 1, %s11
      %p67 = scmp.lt.s32.totalorder %s11, 3
      %p68 = pnand %p66, %p67
      %p69 = pneg %p68
      // Predicated region
      $region9: #{tpu_custom_call.1} parent=5 // pred_check
        _
      $region10: #{tpu_custom_call.1} parent=5 // pred_check_branch
        %71 = sbr.rel (%p68) target = $region12
      $region11: #{tpu_custom_call.1} parent=5 // pred_region
        %s72 = ssub.s32 %s11, 1
        // Predicated region
        $region13: #{tpu_custom_call.1} parent=11 // pred_check
          %p73 = pneg %p32
        $region14: #{tpu_custom_call.1} parent=11 // pred_check_branch
          %75 = sbr.rel (%p73) target = $region16
        $region15: #{tpu_custom_call.1} parent=11 // pred_region
          %s77 = ssub.s32 128, 128
          %78 = vsyncadd [#allocation3], %s77
          %s80 = sshll.u32 [#allocation2], 4
          %s81 = int_to_ptr.vmem [resolvable:$true] %s80
          %83 = dma.hbm_to_vmem [thread:$0]  %s0, 128, %s81, [#allocation3]
        $region16: #{tpu_custom_call.1} parent=11 // pred_fallthru
          _
      $region12: #{tpu_custom_call.1} parent=5 // pred_fallthru
        _
      %p84 = scmp.lt.s32.totalorder %s11, 2
      // Predicated region
      $region17: #{tpu_custom_call.1} parent=5 // pred_check
        %p85 = pneg %p84
      $region18: #{tpu_custom_call.1} parent=5 // pred_check_branch
        %87 = sbr.rel (%p85) target = $region20
      $region19: #{tpu_custom_call.1} parent=5 // pred_region
        _
      $region20: #{tpu_custom_call.1} parent=5 // pred_fallthru
        _
      %p88 = scmp.le.s32.totalorder 1, %s11
      %p89 = scmp.lt.s32.totalorder %s11, 3
      %p90 = pnand %p88, %p89
      %p91 = pneg %p90
      // Predicated region
      $region21: #{tpu_custom_call.1} parent=5 // pred_check
        _
      $region22: #{tpu_custom_call.1} parent=5 // pred_check_branch
        %93 = sbr.rel (%p90) target = $region24
      $region23: #{tpu_custom_call.1} parent=5 // pred_region
        %s94 = ssub.s32 %s11, 1
        // Predicated region
        $region25: #{tpu_custom_call.1} parent=23 // pred_check
          %p95 = pneg %p32
        $region26: #{tpu_custom_call.1} parent=23 // pred_check_branch
          %97 = sbr.rel (%p95) target = $region28
        $region27: #{tpu_custom_call.1} parent=23 // pred_region
          %98 = dma.done [#allocation3], 128
        $region28: #{tpu_custom_call.1} parent=23 // pred_fallthru
          _
        %p99 = pneg %p32
        %p100 = pneg %p29
        %p101 = pneg %p58
        %p102 = pneg %p55
        %s103 = sand.u32 %s45, 1
        %s104 = scalar_lea.sflag [#allocation4], %s103
        %s105 = sand.u32 %s45, 1
        %s106 = smul.addr %s105, 8
        %s107 = scalar_lea.vmem [#allocation5], %s106
        %v108 = vld [vmem:[#allocation2] sm:$0xff]
        %v109 = vmul.f32 %v108, 2.0
        %110 = vst [vmem:[%s107] sm:$0xff] %v109
        %s111 = sand.u32 %s45, 1
        %s112 = scalar_lea.sflag [#allocation4], %s111
        %s113 = sand.u32 %s45, 1
        %s114 = smul.addr %s113, 8
        %s115 = scalar_lea.vmem [#allocation5], %s114
        // Predicated region
        $region29: #{tpu_custom_call.1} parent=23 // pred_check
          %p116 = pneg %p55
        $region30: #{tpu_custom_call.1} parent=23 // pred_check_branch
          %118 = sbr.rel (%p116) target = $region32
        $region31: #{tpu_custom_call.1} parent=23 // pred_region
          %s120 = ssub.s32 128, 128
          %121 = vsyncadd %s112, %s120
          %s122 = smul.addr %s16, 128
          %s123 = scalar_lea.hbm %s1, %s122
          %s125 = sshll.u32 %s115, 4
          %s126 = int_to_ptr.vmem [resolvable:$true] %s125
          %128 = dma.vmem_to_hbm [thread:$0]  %s126, 128, %s123, %s112
        $region32: #{tpu_custom_call.1} parent=23 // pred_fallthru
          _
      $region24: #{tpu_custom_call.1} parent=5 // pred_fallthru
        _
      %p129 = scmp.le.s32.totalorder 2, %s11
      // Predicated region
      $region33: #{tpu_custom_call.1} parent=5 // pred_check
        %p130 = pneg %p129
      $region34: #{tpu_custom_call.1} parent=5 // pred_check_branch
        %132 = sbr.rel (%p130) target = $region36
      $region35: #{tpu_custom_call.1} parent=5 // pred_region
        %s133 = ssub.s32 %s11, 2
        // Predicated region
        $region37: #{tpu_custom_call.1} parent=35 // pred_check
          %p134 = pneg %p61
        $region38: #{tpu_custom_call.1} parent=35 // pred_check_branch
          %136 = sbr.rel (%p134) target = $region40
        $region39: #{tpu_custom_call.1} parent=35 // pred_region
          %s137 = sand.u32 %s46, 1
          %s138 = scalar_lea.sflag [#allocation4], %s137
          %s139 = sand.u32 %s46, 1
          %s140 = smul.addr %s139, 8
          %s141 = scalar_lea.vmem [#allocation5], %s140
          %142 = dma.done %s138, 128
        $region40: #{tpu_custom_call.1} parent=35 // pred_fallthru
          _
      $region36: #{tpu_custom_call.1} parent=5 // pred_fallthru
        _
    $region6: #{tpu_custom_call.1} parent=1 // loop_footer
      %s15 = sadd.s32 1, %s11
    $region7: #{tpu_custom_call.1} parent=1 // loop_footer_branch
      %10 = sbr.rel target = $region3
    $region8: #{tpu_custom_call.1} parent=1 // loop_exit
      _
    %143 = vsyncpa [#allocation3], 1
    %s144 = scalar_lea.sflag [#allocation3], 1
    %145 = vsyncpa %s144, 1
    %146 = vsyncpa [#allocation4], 1
    %s147 = scalar_lea.sflag [#allocation4], 1
    %148 = vsyncpa %s147, 1

// kernel: tpu_custom_call.1
$region0: #{tpu_custom_call.1}
  #allocation0 [shape = 'u32[]', space=smem, size = 0x4, offset = 0x4, fixed_abs, tag = 'smem constant byte address 0x4 - core index']
  #allocation1 [shape = 'u32[144,128]{1,0:T(1,128)}', space=vmem, size = 0x12000, scoped, tag = 'internal scratch']
  %s0 = inlined_call_operand.vmem [shape: f32[130,32], index: 0, kind: input, shape index: {}]
  %s1 = inlined_call_operand.vmem [shape: bf16[32,32], index: 1, kind: input, shape index: {}]
  %s2 = inlined_call_operand.vmem [shape: f32[1,32], index: 2, kind: input, shape index: {}]
  %s3 = inlined_call_operand.vmem [shape: bf16[32,32], index: 3, kind: input, shape index: {}]
  %s4 = inlined_call_operand.vmem [shape: f32[1,32], index: 4, kind: input, shape index: {}]
  %s5 = inlined_call_operand.vmem [shape: bf16[32,16], index: 5, kind: input, shape index: {}]
  %s6 = inlined_call_operand.vmem [shape: f32[1,16], index: 6, kind: input, shape index: {}]
  %s7 = inlined_call_operand.vmem [shape: f32[130,16], index: 7, kind: output, shape index: {}]
  %s8 = sld [smem:[#allocation0]]
  $region72: #{tpu_custom_call.1} parent=0
    _
  %s10 = ssub.s32 1, %s8
  %s11 = scalar_select 0, %s10, %s8
  $region1: #{tpu_custom_call.1} parent=0
    #allocation2 [shape = 'u8[73728]{0}', space=vmem, size = 0x12000, scoped, tag = 'output window, operand 0, single buffered']
    // Predicated region
    $region2: #{tpu_custom_call.1} parent=1 // pred_check
      _
    $region3: #{tpu_custom_call.1} parent=1 // pred_check_branch
      %13 = sbr.rel (0) target = $region5
    $region4: #{tpu_custom_call.1} parent=1 // pred_region
      _
    $region5: #{tpu_custom_call.1} parent=1 // pred_fallthru
      _
    // Predicated region
    $region6: #{tpu_custom_call.1} parent=1 // pred_check
      _
    $region7: #{tpu_custom_call.1} parent=1 // pred_check_branch
      %15 = sbr.rel (0) target = $region9
    $region8: #{tpu_custom_call.1} parent=1 // pred_region
      _
    $region9: #{tpu_custom_call.1} parent=1 // pred_fallthru
      _
    // Predicated region
    $region10: #{tpu_custom_call.1} parent=1 // pred_check
      _
    $region11: #{tpu_custom_call.1} parent=1 // pred_check_branch
      %17 = sbr.rel (0) target = $region13
    $region12: #{tpu_custom_call.1} parent=1 // pred_region
      _
    $region13: #{tpu_custom_call.1} parent=1 // pred_fallthru
      _
    // Predicated region
    $region14: #{tpu_custom_call.1} parent=1 // pred_check
      _
    $region15: #{tpu_custom_call.1} parent=1 // pred_check_branch
      %19 = sbr.rel (0) target = $region17
    $region16: #{tpu_custom_call.1} parent=1 // pred_region
      _
    $region17: #{tpu_custom_call.1} parent=1 // pred_fallthru
      _
    // Predicated region
    $region18: #{tpu_custom_call.1} parent=1 // pred_check
      _
    $region19: #{tpu_custom_call.1} parent=1 // pred_check_branch
      %21 = sbr.rel (0) target = $region21
    $region20: #{tpu_custom_call.1} parent=1 // pred_region
      _
    $region21: #{tpu_custom_call.1} parent=1 // pred_fallthru
      _
    // Predicated region
    $region22: #{tpu_custom_call.1} parent=1 // pred_check
      _
    $region23: #{tpu_custom_call.1} parent=1 // pred_check_branch
      %23 = sbr.rel (0) target = $region25
    $region24: #{tpu_custom_call.1} parent=1 // pred_region
      _
    $region25: #{tpu_custom_call.1} parent=1 // pred_fallthru
      _
    // Predicated region
    $region26: #{tpu_custom_call.1} parent=1 // pred_check
      _
    $region27: #{tpu_custom_call.1} parent=1 // pred_check_branch
      %25 = sbr.rel (0) target = $region29
    $region28: #{tpu_custom_call.1} parent=1 // pred_region
      _
    $region29: #{tpu_custom_call.1} parent=1 // pred_fallthru
      _
    %v27 = vld [vmem:[%s0] sm:$0xff]
    %v28 = vld [vmem:[%s0 + $0x8] sm:$0xff]
    %v29 = vld [vmem:[%s0 + $0x10] sm:$0xff]
    %v30 = vld [vmem:[%s0 + $0x18] sm:$0xff]
    %v31 = vld [vmem:[%s0 + $0x20] sm:$0xff]
    %v32 = vld [vmem:[%s0 + $0x28] sm:$0xff]
    %v33 = vld [vmem:[%s0 + $0x30] sm:$0xff]
    %v34 = vld [vmem:[%s0 + $0x38] sm:$0xff]
    %v35 = vld [vmem:[%s0 + $0x40] sm:$0xff]
    %v36 = vld [vmem:[%s0 + $0x48] sm:$0xff]
    %v37 = vld [vmem:[%s0 + $0x50] sm:$0xff]
    %v38 = vld [vmem:[%s0 + $0x58] sm:$0xff]
    %v39 = vld [vmem:[%s0 + $0x60] sm:$0xff]
    %v40 = vld [vmem:[%s0 + $0x68] sm:$0xff]
    %v41 = vld [vmem:[%s0 + $0x70] sm:$0xff]
    %v42 = vld [vmem:[%s0 + $0x78] sm:$0xff]
    %v43 = vld [vmem:[%s0 + $0x80] sm:$0xff]
    %v44 = vld [vmem:[%s0 + $0x88] sm:$0xff]
    %v45 = vpack.c.bf16 %v28, %v27
    %v46 = vpack.c.bf16 %v30, %v29
    %v47 = vpack.c.bf16 %v32, %v31
    %v48 = vpack.c.bf16 %v34, %v33
    %v49 = vpack.c.bf16 %v36, %v35
    %v50 = vpack.c.bf16 %v38, %v37
    %v51 = vpack.c.bf16 %v40, %v39
    %v52 = vpack.c.bf16 %v42, %v41
    %v53 = vpack.c.bf16 %v44, %v43
    %v54 = vld [vmem:[%s1] sm:$0xf]
    %v55 = vld [vmem:[%s1 + $0x4] sm:$0xf]
    %v56 = vld [vmem:[%s1 + $0x8] sm:$0xf]
    %v57 = vld [vmem:[%s1 + $0xc] sm:$0xf]
    %v58 = vld [vmem:[%s2] sm:$0x1]
    %v60 = vlaneseq
    %v61 = vshrl.u32 %v60, 7
    %v62 = vsub.s32 0, %v61
    %v63 = vrot.slane %v58, %v62
    %v69 = vunpack.c.l.b16 %v54
    %v70 = vunpack.c.l.b16 %v55
    %v71 = vunpack.c.l.b16 %v56
    %v72 = vunpack.c.l.b16 %v57
    %v73 = vpack.c.b16 %v70, %v69
    %v74 = vpack.c.b16 %v72, %v71
    %vm77 = vcmask 261120
    %v79 = vsel %vm77, %v45, 0
    %v82 = vsel %vm77, %v46, 0
    %v85 = vsel %vm77, %v47, 0
    %v88 = vsel %vm77, %v48, 0
    %v91 = vsel %vm77, %v49, 0
    %v94 = vsel %vm77, %v50, 0
    %v97 = vsel %vm77, %v51, 0
    %v100 = vsel %vm77, %v52, 0
    %v103 = vsel %vm77, %v53, 0
    %105 = vmatprep.subr.bf16.mxu0 0
    %106 = vmatpush1.bf16.msra.mxu0 %v73
    %107 = vmatprep.subr.bf16.mxu0 0
    %108 = vmatpush1.bf16.msra.mxu0 %v74
    %109 = vmatprep.subr.bf16.mxu0 0
    %110 = vmatpush1.bf16.msra.mxu0 0
    %111 = vmatprep.subr.bf16.mxu0 0
    %112 = vmatpush1.bf16.msra.mxu0 0
    %113 = vmatprep.subr.bf16.mxu0 0
    %114 = vmatpush1.bf16.msra.mxu0 0
    %115 = vmatprep.subr.bf16.mxu0 0
    %116 = vmatpush1.bf16.msra.mxu0 0
    %117 = vmatprep.subr.bf16.mxu0 0
    %118 = vmatpush1.bf16.msra.mxu0 0
    %119 = vmatprep.subr.bf16.mxu0 0
    %120 = vmatpush1.bf16.msra.mxu0 0
    %121 = vmatprep.subr.bf16.mxu0 0
    %122 = vmatpush1.bf16.msra.mxu0 0
    %123 = vmatprep.subr.bf16.mxu0 0
    %124 = vmatpush1.bf16.msra.mxu0 0
    %125 = vmatprep.subr.bf16.mxu0 0
    %126 = vmatpush1.bf16.msra.mxu0 0
    %127 = vmatprep.subr.bf16.mxu0 0
    %128 = vmatpush1.bf16.msra.mxu0 0
    %129 = vmatprep.subr.bf16.mxu0 0
    %130 = vmatpush1.bf16.msra.mxu0 0
    %131 = vmatprep.subr.bf16.mxu0 0
    %132 = vmatpush1.bf16.msra.mxu0 0
    %133 = vmatprep.subr.bf16.mxu0 0
    %134 = vmatpush1.bf16.msra.mxu0 0
    %135 = vmatprep.subr.bf16.mxu0 0
    %136 = vmatpush1.bf16.msra.mxu0 0
    %137 = vmatprep.mubr.bf16.mxu0 0
    %138 = vmatmul.mubr.bf16.gmra.mrb[0].mxu0 %v79
    %v139 = vpop.f32.mrb[0].mxu0
    %v140 = vadd.f32 %v63, %v139
    %v141 = vpop.f32.mrb[0].mxu0
    %v142 = vpop.f32.mrb[0].mxu0
    %v143 = vadd.f32 %v63, %v142
    %v144 = vpop.f32.mrb[0].mxu0
    %145 = vmatprep.mubr.bf16.mxu0 0
    %146 = vmatmul.mubr.bf16.gmra.mrb[0].mxu0 %v82
    %v147 = vpop.f32.mrb[0].mxu0
    %v148 = vadd.f32 %v63, %v147
    %v149 = vpop.f32.mrb[0].mxu0
    %v150 = vpop.f32.mrb[0].mxu0
    %v151 = vadd.f32 %v63, %v150
    %v152 = vpop.f32.mrb[0].mxu0
    %153 = vmatprep.mubr.bf16.mxu0 0
    %154 = vmatmul.mubr.bf16.gmra.mrb[0].mxu0 %v85
    %v155 = vpop.f32.mrb[0].mxu0
    %v156 = vadd.f32 %v63, %v155
    %v157 = vpop.f32.mrb[0].mxu0
    %v158 = vpop.f32.mrb[0].mxu0
    %v159 = vadd.f32 %v63, %v158
    %v160 = vpop.f32.mrb[0].mxu0
    %161 = vmatprep.mubr.bf16.mxu0 0
    %162 = vmatmul.mubr.bf16.gmra.mrb[0].mxu0 %v88
    %v163 = vpop.f32.mrb[0].mxu0
    %v164 = vadd.f32 %v63, %v163
    %v165 = vpop.f32.mrb[0].mxu0
    %v166 = vpop.f32.mrb[0].mxu0
    %v167 = vadd.f32 %v63, %v166
    %v168 = vpop.f32.mrb[0].mxu0
    %169 = vmatprep.mubr.bf16.mxu0 0
    %170 = vmatmul.mubr.bf16.gmra.mrb[0].mxu0 %v91
    %v171 = vpop.f32.mrb[0].mxu0
    %v172 = vadd.f32 %v63, %v171
    %v173 = vpop.f32.mrb[0].mxu0
    %v174 = vpop.f32.mrb[0].mxu0
    %v175 = vadd.f32 %v63, %v174
    %v176 = vpop.f32.mrb[0].mxu0
    %177 = vmatprep.mubr.bf16.mxu0 0
    %178 = vmatmul.mubr.bf16.gmra.mrb[0].mxu0 %v94
    %v179 = vpop.f32.mrb[0].mxu0
    %v180 = vadd.f32 %v63, %v179
    %v181 = vpop.f32.mrb[0].mxu0
    %v182 = vpop.f32.mrb[0].mxu0
    %v183 = vadd.f32 %v63, %v182
    %v184 = vpop.f32.mrb[0].mxu0
    %185 = vmatprep.mubr.bf16.mxu0 0
    %186 = vmatmul.mubr.bf16.gmra.mrb[0].mxu0 %v97
    %v187 = vpop.f32.mrb[0].mxu0
    %v188 = vadd.f32 %v63, %v187
    %v189 = vpop.f32.mrb[0].mxu0
    %v190 = vpop.f32.mrb[0].mxu0
    %v191 = vadd.f32 %v63, %v190
    %v192 = vpop.f32.mrb[0].mxu0
    %193 = vmatprep.mubr.bf16.mxu0 0
    %194 = vmatmul.mubr.bf16.gmra.mrb[0].mxu0 %v100
    %v195 = vpop.f32.mrb[0].mxu0
    %v196 = vadd.f32 %v63, %v195
    %v197 = vpop.f32.mrb[0].mxu0
    %v198 = vpop.f32.mrb[0].mxu0
    %v199 = vadd.f32 %v63, %v198
    %v200 = vpop.f32.mrb[0].mxu0
    %201 = vmatprep.mubr.bf16.mxu0 0
    %202 = vmatmul.mubr.bf16.gmra.mrb[0].mxu0 %v103
    %v203 = vpop.f32.mrb[0].mxu0
    %v204 = vadd.f32 %v63, %v203
    %v205 = vpop.f32.mrb[0].mxu0
    %v206 = vpop.f32.mrb[0].mxu0
    %v207 = vadd.f32 %v63, %v206
    %v208 = vpop.f32.mrb[0].mxu0
    %209 = vdwg.mxu0
    %v210 = vmax.f32 %v140, 0.0
    %v211 = vmax.f32 %v143, 0.0
    %v212 = vmax.f32 %v148, 0.0
    %v213 = vmax.f32 %v151, 0.0
    %v214 = vmax.f32 %v156, 0.0
    %v215 = vmax.f32 %v159, 0.0
    %v216 = vmax.f32 %v164, 0.0
    %v217 = vmax.f32 %v167, 0.0
    %v218 = vmax.f32 %v172, 0.0
    %v219 = vmax.f32 %v175, 0.0
    %v220 = vmax.f32 %v180, 0.0
    %v221 = vmax.f32 %v183, 0.0
    %v222 = vmax.f32 %v188, 0.0
    %v223 = vmax.f32 %v191, 0.0
    %v224 = vmax.f32 %v196, 0.0
    %v225 = vmax.f32 %v199, 0.0
    %v226 = vmax.f32 %v204, 0.0
    %v227 = vmax.f32 %v207, 0.0
    %v228 = vpack.c.bf16 %v211, %v210
    %v229 = vpack.c.bf16 %v213, %v212
    %v230 = vpack.c.bf16 %v215, %v214
    %v231 = vpack.c.bf16 %v217, %v216
    %v232 = vpack.c.bf16 %v219, %v218
    %v233 = vpack.c.bf16 %v221, %v220
    %v234 = vpack.c.bf16 %v223, %v222
    %v235 = vpack.c.bf16 %v225, %v224
    %v236 = vpack.c.bf16 %v227, %v226
    %v237 = vld [vmem:[%s3] sm:$0xf]
    %v238 = vld [vmem:[%s3 + $0x4] sm:$0xf]
    %v239 = vld [vmem:[%s3 + $0x8] sm:$0xf]
    %v240 = vld [vmem:[%s3 + $0xc] sm:$0xf]
    %v241 = vld [vmem:[%s4] sm:$0x1]
    %v243 = vlaneseq
    %v244 = vshrl.u32 %v243, 7
    %v245 = vsub.s32 0, %v244
    %v246 = vrot.slane %v241, %v245
    %v252 = vunpack.c.l.b16 %v237
    %v253 = vunpack.c.l.b16 %v238
    %v254 = vunpack.c.l.b16 %v239
    %v255 = vunpack.c.l.b16 %v240
    %v256 = vpack.c.b16 %v253, %v252
    %v257 = vpack.c.b16 %v255, %v254
    %v261 = vsel %vm77, %v228, 0
    %v264 = vsel %vm77, %v229, 0
    %v267 = vsel %vm77, %v230, 0
    %v270 = vsel %vm77, %v231, 0
    %v273 = vsel %vm77, %v232, 0
    %v276 = vsel %vm77, %v233, 0
    %v279 = vsel %vm77, %v234, 0
    %v282 = vsel %vm77, %v235, 0
    %v285 = vsel %vm77, %v236, 0
    %287 = vmatprep.subr.bf16.mxu0 0
    %288 = vmatpush1.bf16.msra.mxu0 %v256
    %289 = vmatprep.subr.bf16.mxu0 0
    %290 = vmatpush1.bf16.msra.mxu0 %v257
    %291 = vmatprep.subr.bf16.mxu0 0
    %292 = vmatpush1.bf16.msra.mxu0 0
    %293 = vmatprep.subr.bf16.mxu0 0
    %294 = vmatpush1.bf16.msra.mxu0 0
    %295 = vmatprep.subr.bf16.mxu0 0
    %296 = vmatpush1.bf16.msra.mxu0 0
    %297 = vmatprep.subr.bf16.mxu0 0
    %298 = vmatpush1.bf16.msra.mxu0 0
    %299 = vmatprep.subr.bf16.mxu0 0
    %300 = vmatpush1.bf16.msra.mxu0 0
    %301 = vmatprep.subr.bf16.mxu0 0
    %302 = vmatpush1.bf16.msra.mxu0 0
    %303 = vmatprep.subr.bf16.mxu0 0
    %304 = vmatpush1.bf16.msra.mxu0 0
    %305 = vmatprep.subr.bf16.mxu0 0
    %306 = vmatpush1.bf16.msra.mxu0 0
    %307 = vmatprep.subr.bf16.mxu0 0
    %308 = vmatpush1.bf16.msra.mxu0 0
    %309 = vmatprep.subr.bf16.mxu0 0
    %310 = vmatpush1.bf16.msra.mxu0 0
    %311 = vmatprep.subr.bf16.mxu0 0
    %312 = vmatpush1.bf16.msra.mxu0 0
    %313 = vmatprep.subr.bf16.mxu0 0
    %314 = vmatpush1.bf16.msra.mxu0 0
    %315 = vmatprep.subr.bf16.mxu0 0
    %316 = vmatpush1.bf16.msra.mxu0 0
    %317 = vmatprep.subr.bf16.mxu0 0
    %318 = vmatpush1.bf16.msra.mxu0 0
    %319 = vmatprep.mubr.bf16.mxu0 0
    %320 = vmatmul.mubr.bf16.gmra.mrb[0].mxu0 %v261
    %v321 = vpop.f32.mrb[0].mxu0
    %v322 = vadd.f32 %v246, %v321
    %v323 = vpop.f32.mrb[0].mxu0
    %v324 = vpop.f32.mrb[0].mxu0
    %v325 = vadd.f32 %v246, %v324
    %v326 = vpop.f32.mrb[0].mxu0
    %327 = vmatprep.mubr.bf16.mxu0 0
    %328 = vmatmul.mubr.bf16.gmra.mrb[0].mxu0 %v264
    %v329 = vpop.f32.mrb[0].mxu0
    %v330 = vadd.f32 %v246, %v329
    %v331 = vpop.f32.mrb[0].mxu0
    %v332 = vpop.f32.mrb[0].mxu0
    %v333 = vadd.f32 %v246, %v332
    %v334 = vpop.f32.mrb[0].mxu0
    %335 = vmatprep.mubr.bf16.mxu0 0
    %336 = vmatmul.mubr.bf16.gmra.mrb[0].mxu0 %v267
    %v337 = vpop.f32.mrb[0].mxu0
    %v338 = vadd.f32 %v246, %v337
    %v339 = vpop.f32.mrb[0].mxu0
    %v340 = vpop.f32.mrb[0].mxu0
    %v341 = vadd.f32 %v246, %v340
    %v342 = vpop.f32.mrb[0].mxu0
    %343 = vmatprep.mubr.bf16.mxu0 0
    %344 = vmatmul.mubr.bf16.gmra.mrb[0].mxu0 %v270
    %v345 = vpop.f32.mrb[0].mxu0
    %v346 = vadd.f32 %v246, %v345
    %v347 = vpop.f32.mrb[0].mxu0
    %v348 = vpop.f32.mrb[0].mxu0
    %v349 = vadd.f32 %v246, %v348
    %v350 = vpop.f32.mrb[0].mxu0
    %351 = vmatprep.mubr.bf16.mxu0 0
    %352 = vmatmul.mubr.bf16.gmra.mrb[0].mxu0 %v273
    %v353 = vpop.f32.mrb[0].mxu0
    %v354 = vadd.f32 %v246, %v353
    %v355 = vpop.f32.mrb[0].mxu0
    %v356 = vpop.f32.mrb[0].mxu0
    %v357 = vadd.f32 %v246, %v356
    %v358 = vpop.f32.mrb[0].mxu0
    %359 = vmatprep.mubr.bf16.mxu0 0
    %360 = vmatmul.mubr.bf16.gmra.mrb[0].mxu0 %v276
    %v361 = vpop.f32.mrb[0].mxu0
    %v362 = vadd.f32 %v246, %v361
    %v363 = vpop.f32.mrb[0].mxu0
    %v364 = vpop.f32.mrb[0].mxu0
    %v365 = vadd.f32 %v246, %v364
    %v366 = vpop.f32.mrb[0].mxu0
    %367 = vmatprep.mubr.bf16.mxu0 0
    %368 = vmatmul.mubr.bf16.gmra.mrb[0].mxu0 %v279
    %v369 = vpop.f32.mrb[0].mxu0
    %v370 = vadd.f32 %v246, %v369
    %v371 = vpop.f32.mrb[0].mxu0
    %v372 = vpop.f32.mrb[0].mxu0
    %v373 = vadd.f32 %v246, %v372
    %v374 = vpop.f32.mrb[0].mxu0
    %375 = vmatprep.mubr.bf16.mxu0 0
    %376 = vmatmul.mubr.bf16.gmra.mrb[0].mxu0 %v282
    %v377 = vpop.f32.mrb[0].mxu0
    %v378 = vadd.f32 %v246, %v377
    %v379 = vpop.f32.mrb[0].mxu0
    %v380 = vpop.f32.mrb[0].mxu0
    %v381 = vadd.f32 %v246, %v380
    %v382 = vpop.f32.mrb[0].mxu0
    %383 = vmatprep.mubr.bf16.mxu0 0
    %384 = vmatmul.mubr.bf16.gmra.mrb[0].mxu0 %v285
    %v385 = vpop.f32.mrb[0].mxu0
    %v386 = vadd.f32 %v246, %v385
    %v387 = vpop.f32.mrb[0].mxu0
    %v388 = vpop.f32.mrb[0].mxu0
    %v389 = vadd.f32 %v246, %v388
    %v390 = vpop.f32.mrb[0].mxu0
    %391 = vdwg.mxu0
    %v392 = vmax.f32 %v322, 0.0
    %v393 = vmax.f32 %v325, 0.0
    %v394 = vmax.f32 %v330, 0.0
    %v395 = vmax.f32 %v333, 0.0
    %v396 = vmax.f32 %v338, 0.0
    %v397 = vmax.f32 %v341, 0.0
    %v398 = vmax.f32 %v346, 0.0
    %v399 = vmax.f32 %v349, 0.0
    %v400 = vmax.f32 %v354, 0.0
    %v401 = vmax.f32 %v357, 0.0
    %v402 = vmax.f32 %v362, 0.0
    %v403 = vmax.f32 %v365, 0.0
    %v404 = vmax.f32 %v370, 0.0
    %v405 = vmax.f32 %v373, 0.0
    %v406 = vmax.f32 %v378, 0.0
    %v407 = vmax.f32 %v381, 0.0
    %v408 = vmax.f32 %v386, 0.0
    %v409 = vmax.f32 %v389, 0.0
    %v410 = vpack.c.bf16 %v393, %v392
    %v411 = vpack.c.bf16 %v395, %v394
    %v412 = vpack.c.bf16 %v397, %v396
    %v413 = vpack.c.bf16 %v399, %v398
    %v414 = vpack.c.bf16 %v401, %v400
    %v415 = vpack.c.bf16 %v403, %v402
    %v416 = vpack.c.bf16 %v405, %v404
    %v417 = vpack.c.bf16 %v407, %v406
    %v418 = vpack.c.bf16 %v409, %v408
    %v419 = vld [vmem:[%s5] sm:$0xf]
    %v420 = vld [vmem:[%s5 + $0x4] sm:$0xf]
    %v421 = vld [vmem:[%s5 + $0x8] sm:$0xf]
    %v422 = vld [vmem:[%s5 + $0xc] sm:$0xf]
    %v423 = vld [vmem:[%s6] sm:$0x1]
    %v425 = vlaneseq
    %v426 = vshrl.u32 %v425, 7
    %v427 = vsub.s32 0, %v426
    %v428 = vrot.slane %v423, %v427
    %v434 = vunpack.c.l.b16 %v419
    %v435 = vunpack.c.l.b16 %v420
    %v436 = vunpack.c.l.b16 %v421
    %v437 = vunpack.c.l.b16 %v422
    %v438 = vpack.c.b16 %v435, %v434
    %v439 = vpack.c.b16 %v437, %v436
    %v443 = vsel %vm77, %v410, 0
    %v446 = vsel %vm77, %v411, 0
    %v449 = vsel %vm77, %v412, 0
    %v452 = vsel %vm77, %v413, 0
    %v455 = vsel %vm77, %v414, 0
    %v458 = vsel %vm77, %v415, 0
    %v461 = vsel %vm77, %v416, 0
    %v464 = vsel %vm77, %v417, 0
    %v467 = vsel %vm77, %v418, 0
    %469 = vmatprep.subr.bf16.mxu0 0
    %470 = vmatpush1.bf16.msra.mxu0 %v438
    %471 = vmatprep.subr.bf16.mxu0 0
    %472 = vmatpush1.bf16.msra.mxu0 %v439
    %473 = vmatprep.subr.bf16.mxu0 0
    %474 = vmatpush1.bf16.msra.mxu0 0
    %475 = vmatprep.subr.bf16.mxu0 0
    %476 = vmatpush1.bf16.msra.mxu0 0
    %477 = vmatprep.subr.bf16.mxu0 0
    %478 = vmatpush1.bf16.msra.mxu0 0
    %479 = vmatprep.subr.bf16.mxu0 0
    %480 = vmatpush1.bf16.msra.mxu0 0
    %481 = vmatprep.subr.bf16.mxu0 0
    %482 = vmatpush1.bf16.msra.mxu0 0
    %483 = vmatprep.subr.bf16.mxu0 0
    %484 = vmatpush1.bf16.msra.mxu0 0
    %485 = vmatprep.subr.bf16.mxu0 0
    %486 = vmatpush1.bf16.msra.mxu0 0
    %487 = vmatprep.subr.bf16.mxu0 0
    %488 = vmatpush1.bf16.msra.mxu0 0
    %489 = vmatprep.subr.bf16.mxu0 0
    %490 = vmatpush1.bf16.msra.mxu0 0
    %491 = vmatprep.subr.bf16.mxu0 0
    %492 = vmatpush1.bf16.msra.mxu0 0
    %493 = vmatprep.subr.bf16.mxu0 0
    %494 = vmatpush1.bf16.msra.mxu0 0
    %495 = vmatprep.subr.bf16.mxu0 0
    %496 = vmatpush1.bf16.msra.mxu0 0
    %497 = vmatprep.subr.bf16.mxu0 0
    %498 = vmatpush1.bf16.msra.mxu0 0
    %499 = vmatprep.subr.bf16.mxu0 0
    %500 = vmatpush1.bf16.msra.mxu0 0
    %501 = vmatprep.mubr.bf16.mxu0 0
    %502 = vmatmul.mubr.bf16.gmra.mrb[0].mxu0 %v443
    %v503 = vpop.f32.mrb[0].mxu0
    %v504 = vadd.f32 %v428, %v503
    %v505 = vpop.f32.mrb[0].mxu0
    %v506 = vpop.f32.mrb[0].mxu0
    %v507 = vadd.f32 %v428, %v506
    %v508 = vpop.f32.mrb[0].mxu0
    %509 = vmatprep.mubr.bf16.mxu0 0
    %510 = vmatmul.mubr.bf16.gmra.mrb[0].mxu0 %v446
    %v511 = vpop.f32.mrb[0].mxu0
    %v512 = vadd.f32 %v428, %v511
    %v513 = vpop.f32.mrb[0].mxu0
    %v514 = vpop.f32.mrb[0].mxu0
    %v515 = vadd.f32 %v428, %v514
    %v516 = vpop.f32.mrb[0].mxu0
    %517 = vmatprep.mubr.bf16.mxu0 0
    %518 = vmatmul.mubr.bf16.gmra.mrb[0].mxu0 %v449
    %v519 = vpop.f32.mrb[0].mxu0
    %v520 = vadd.f32 %v428, %v519
    %v521 = vpop.f32.mrb[0].mxu0
    %v522 = vpop.f32.mrb[0].mxu0
    %v523 = vadd.f32 %v428, %v522
    %v524 = vpop.f32.mrb[0].mxu0
    %525 = vmatprep.mubr.bf16.mxu0 0
    %526 = vmatmul.mubr.bf16.gmra.mrb[0].mxu0 %v452
    %v527 = vpop.f32.mrb[0].mxu0
    %v528 = vadd.f32 %v428, %v527
    %v529 = vpop.f32.mrb[0].mxu0
    %v530 = vpop.f32.mrb[0].mxu0
    %v531 = vadd.f32 %v428, %v530
    %v532 = vpop.f32.mrb[0].mxu0
    %533 = vmatprep.mubr.bf16.mxu0 0
    %534 = vmatmul.mubr.bf16.gmra.mrb[0].mxu0 %v455
    %v535 = vpop.f32.mrb[0].mxu0
    %v536 = vadd.f32 %v428, %v535
    %v537 = vpop.f32.mrb[0].mxu0
    %v538 = vpop.f32.mrb[0].mxu0
    %v539 = vadd.f32 %v428, %v538
    %v540 = vpop.f32.mrb[0].mxu0
    %541 = vmatprep.mubr.bf16.mxu0 0
    %542 = vmatmul.mubr.bf16.gmra.mrb[0].mxu0 %v458
    %v543 = vpop.f32.mrb[0].mxu0
    %v544 = vadd.f32 %v428, %v543
    %v545 = vpop.f32.mrb[0].mxu0
    %v546 = vpop.f32.mrb[0].mxu0
    %v547 = vadd.f32 %v428, %v546
    %v548 = vpop.f32.mrb[0].mxu0
    %549 = vmatprep.mubr.bf16.mxu0 0
    %550 = vmatmul.mubr.bf16.gmra.mrb[0].mxu0 %v461
    %v551 = vpop.f32.mrb[0].mxu0
    %v552 = vadd.f32 %v428, %v551
    %v553 = vpop.f32.mrb[0].mxu0
    %v554 = vpop.f32.mrb[0].mxu0
    %v555 = vadd.f32 %v428, %v554
    %v556 = vpop.f32.mrb[0].mxu0
    %557 = vmatprep.mubr.bf16.mxu0 0
    %558 = vmatmul.mubr.bf16.gmra.mrb[0].mxu0 %v464
    %v559 = vpop.f32.mrb[0].mxu0
    %v560 = vadd.f32 %v428, %v559
    %v561 = vpop.f32.mrb[0].mxu0
    %v562 = vpop.f32.mrb[0].mxu0
    %v563 = vadd.f32 %v428, %v562
    %v564 = vpop.f32.mrb[0].mxu0
    %565 = vmatprep.mubr.bf16.mxu0 0
    %566 = vmatmul.mubr.bf16.gmra.mrb[0].mxu0 %v467
    %v567 = vpop.f32.mrb[0].mxu0
    %v568 = vadd.f32 %v428, %v567
    %v569 = vpop.f32.mrb[0].mxu0
    %v570 = vpop.f32.mrb[0].mxu0
    %v571 = vadd.f32 %v428, %v570
    %v572 = vpop.f32.mrb[0].mxu0
    %573 = vdwg.mxu0
    %vm574 = vcmask 130048
    %575 = vst.msk [vmem:[#allocation2] sm:$0xff] %vm574, %v504
    %576 = vst.msk [vmem:[#allocation2 + $0x8] sm:$0xff] %vm574, %v507
    %577 = vst.msk [vmem:[#allocation2 + $0x10] sm:$0xff] %vm574, %v512
    %578 = vst.msk [vmem:[#allocation2 + $0x18] sm:$0xff] %vm574, %v515
    %579 = vst.msk [vmem:[#allocation2 + $0x20] sm:$0xff] %vm574, %v520
    %580 = vst.msk [vmem:[#allocation2 + $0x28] sm:$0xff] %vm574, %v523
    %581 = vst.msk [vmem:[#allocation2 + $0x30] sm:$0xff] %vm574, %v528
    %582 = vst.msk [vmem:[#allocation2 + $0x38] sm:$0xff] %vm574, %v531
    %583 = vst.msk [vmem:[#allocation2 + $0x40] sm:$0xff] %vm574, %v536
    %584 = vst.msk [vmem:[#allocation2 + $0x48] sm:$0xff] %vm574, %v539
    %585 = vst.msk [vmem:[#allocation2 + $0x50] sm:$0xff] %vm574, %v544
    %586 = vst.msk [vmem:[#allocation2 + $0x58] sm:$0xff] %vm574, %v547
    %587 = vst.msk [vmem:[#allocation2 + $0x60] sm:$0xff] %vm574, %v552
    %588 = vst.msk [vmem:[#allocation2 + $0x68] sm:$0xff] %vm574, %v555
    %589 = vst.msk [vmem:[#allocation2 + $0x70] sm:$0xff] %vm574, %v560
    %590 = vst.msk [vmem:[#allocation2 + $0x78] sm:$0xff] %vm574, %v563
    %591 = vst.msk [vmem:[#allocation2 + $0x80] sm:$0xff] %vm574, %v568
    %592 = vst.msk [vmem:[#allocation2 + $0x88] sm:$0xff] %vm574, %v571
    // Predicated region
    $region30: #{tpu_custom_call.1} parent=1 // pred_check
      _
    $region31: #{tpu_custom_call.1} parent=1 // pred_check_branch
      %594 = sbr.rel (0) target = $region33
    $region32: #{tpu_custom_call.1} parent=1 // pred_region
      // Predicated region
      $region34: #{tpu_custom_call.1} parent=32 // pred_check
        _
      $region35: #{tpu_custom_call.1} parent=32 // pred_check_branch
        %596 = sbr.rel (0) target = $region37
      $region36: #{tpu_custom_call.1} parent=32 // pred_region
        // Predicated region
        $region38: #{tpu_custom_call.1} parent=36 // pred_check
          _
        $region39: #{tpu_custom_call.1} parent=36 // pred_check_branch
          %598 = sbr.rel (0) target = $region41
        $region40: #{tpu_custom_call.1} parent=36 // pred_region
          // Predicated region
          $region53: #{tpu_custom_call.1} parent=40 // pred_check
            _
          $region54: #{tpu_custom_call.1} parent=40 // pred_check_branch
            %645 = sbr.rel (0) target = $region56
          $region55: #{tpu_custom_call.1} parent=40 // pred_region
            loop: start=0, step=1, limit=1
            $region57: #{tpu_custom_call.1} parent=55 // loop_pre_header
              _
            $region58: #{tpu_custom_call.1} parent=55 // loop_header
              %s647 = sphi 0, %s651
              %p648 = scmp.ge.s32.totalorder %s647, 1
              %s652 = sphi [#allocation2], [#allocation2]
              %s653 = sphi %s7, %s7
            $region59: #{tpu_custom_call.1} parent=55 // loop_header_branch
              %650 = sbr.rel (%p648) target = $region63
            $region60: #{tpu_custom_call.1} parent=55 // loop_body
              %v654 = vld [vmem:[%s652] sm:$0xff]
              %655 = vst [vmem:[%s653] sm:$0xff] %v654
              %v656 = vld [vmem:[%s652 + $0x8] sm:$0xff]
              %657 = vst [vmem:[%s653 + $0x8] sm:$0xff] %v656
              %v658 = vld [vmem:[%s652 + $0x10] sm:$0xff]
              %659 = vst [vmem:[%s653 + $0x10] sm:$0xff] %v658
              %v660 = vld [vmem:[%s652 + $0x18] sm:$0xff]
              %661 = vst [vmem:[%s653 + $0x18] sm:$0xff] %v660
              %v662 = vld [vmem:[%s652 + $0x20] sm:$0xff]
              %663 = vst [vmem:[%s653 + $0x20] sm:$0xff] %v662
              %v664 = vld [vmem:[%s652 + $0x28] sm:$0xff]
              %665 = vst [vmem:[%s653 + $0x28] sm:$0xff] %v664
              %v666 = vld [vmem:[%s652 + $0x30] sm:$0xff]
              %667 = vst [vmem:[%s653 + $0x30] sm:$0xff] %v666
              %v668 = vld [vmem:[%s652 + $0x38] sm:$0xff]
              %669 = vst [vmem:[%s653 + $0x38] sm:$0xff] %v668
              %v670 = vld [vmem:[%s652 + $0x40] sm:$0xff]
              %671 = vst [vmem:[%s653 + $0x40] sm:$0xff] %v670
              %v672 = vld [vmem:[%s652 + $0x48] sm:$0xff]
              %673 = vst [vmem:[%s653 + $0x48] sm:$0xff] %v672
              %v674 = vld [vmem:[%s652 + $0x50] sm:$0xff]
              %675 = vst [vmem:[%s653 + $0x50] sm:$0xff] %v674
              %v676 = vld [vmem:[%s652 + $0x58] sm:$0xff]
              %677 = vst [vmem:[%s653 + $0x58] sm:$0xff] %v676
              %v678 = vld [vmem:[%s652 + $0x60] sm:$0xff]
              %679 = vst [vmem:[%s653 + $0x60] sm:$0xff] %v678
              %v680 = vld [vmem:[%s652 + $0x68] sm:$0xff]
              %681 = vst [vmem:[%s653 + $0x68] sm:$0xff] %v680
              %v682 = vld [vmem:[%s652 + $0x70] sm:$0xff]
              %683 = vst [vmem:[%s653 + $0x70] sm:$0xff] %v682
              %v684 = vld [vmem:[%s652 + $0x78] sm:$0xff]
              %685 = vst [vmem:[%s653 + $0x78] sm:$0xff] %v684
              %v686 = vld [vmem:[%s652 + $0x80] sm:$0xff]
              %687 = vst [vmem:[%s653 + $0x80] sm:$0xff] %v686
            $region61: #{tpu_custom_call.1} parent=55 // loop_footer
              %s651 = sadd.s32 1, %s647
            $region62: #{tpu_custom_call.1} parent=55 // loop_footer_branch
              %646 = sbr.rel target = $region58
            $region63: #{tpu_custom_call.1} parent=55 // loop_exit
              _
          $region56: #{tpu_custom_call.1} parent=40 // pred_fallthru
            _
          // Predicated region
          $region64: #{tpu_custom_call.1} parent=40 // pred_check
            _
          $region65: #{tpu_custom_call.1} parent=40 // pred_check_branch
            %689 = sbr.rel target = $region67
          $region66: #{tpu_custom_call.1} parent=40 // pred_region
            _
          $region67: #{tpu_custom_call.1} parent=40 // pred_fallthru
            _
        $region41: #{tpu_custom_call.1} parent=36 // pred_fallthru
          _
        // Predicated region
        $region42: #{tpu_custom_call.1} parent=36 // pred_check
          _
        $region43: #{tpu_custom_call.1} parent=36 // pred_check_branch
          %600 = sbr.rel target = $region45
        $region44: #{tpu_custom_call.1} parent=36 // pred_region
          loop: start=0, step=1, limit=1
          $region46: #{tpu_custom_call.1} parent=44 // loop_pre_header
            _
          $region47: #{tpu_custom_call.1} parent=44 // loop_header
            %s603 = sphi 0, %s607
            %p604 = scmp.ge.s32.totalorder %s603, 1
            %s608 = sphi [#allocation2], [#allocation2]
            %s609 = sphi %s7, %s7
          $region48: #{tpu_custom_call.1} parent=44 // loop_header_branch
            %606 = sbr.rel (%p604) target = $region52
          $region49: #{tpu_custom_call.1} parent=44 // loop_body
            %v610 = vld [vmem:[%s608] sm:$0xff]
            %611 = vst [vmem:[%s609] sm:$0xff] %v610
            %v612 = vld [vmem:[%s608 + $0x8] sm:$0xff]
            %613 = vst [vmem:[%s609 + $0x8] sm:$0xff] %v612
            %v614 = vld [vmem:[%s608 + $0x10] sm:$0xff]
            %615 = vst [vmem:[%s609 + $0x10] sm:$0xff] %v614
            %v616 = vld [vmem:[%s608 + $0x18] sm:$0xff]
            %617 = vst [vmem:[%s609 + $0x18] sm:$0xff] %v616
            %v618 = vld [vmem:[%s608 + $0x20] sm:$0xff]
            %619 = vst [vmem:[%s609 + $0x20] sm:$0xff] %v618
            %v620 = vld [vmem:[%s608 + $0x28] sm:$0xff]
            %621 = vst [vmem:[%s609 + $0x28] sm:$0xff] %v620
            %v622 = vld [vmem:[%s608 + $0x30] sm:$0xff]
            %623 = vst [vmem:[%s609 + $0x30] sm:$0xff] %v622
            %v624 = vld [vmem:[%s608 + $0x38] sm:$0xff]
            %625 = vst [vmem:[%s609 + $0x38] sm:$0xff] %v624
            %v626 = vld [vmem:[%s608 + $0x40] sm:$0xff]
            %627 = vst [vmem:[%s609 + $0x40] sm:$0xff] %v626
            %v628 = vld [vmem:[%s608 + $0x48] sm:$0xff]
            %629 = vst [vmem:[%s609 + $0x48] sm:$0xff] %v628
            %v630 = vld [vmem:[%s608 + $0x50] sm:$0xff]
            %631 = vst [vmem:[%s609 + $0x50] sm:$0xff] %v630
            %v632 = vld [vmem:[%s608 + $0x58] sm:$0xff]
            %633 = vst [vmem:[%s609 + $0x58] sm:$0xff] %v632
            %v634 = vld [vmem:[%s608 + $0x60] sm:$0xff]
            %635 = vst [vmem:[%s609 + $0x60] sm:$0xff] %v634
            %v636 = vld [vmem:[%s608 + $0x68] sm:$0xff]
            %637 = vst [vmem:[%s609 + $0x68] sm:$0xff] %v636
            %v638 = vld [vmem:[%s608 + $0x70] sm:$0xff]
            %639 = vst [vmem:[%s609 + $0x70] sm:$0xff] %v638
            %v640 = vld [vmem:[%s608 + $0x78] sm:$0xff]
            %641 = vst [vmem:[%s609 + $0x78] sm:$0xff] %v640
            %v642 = vld [vmem:[%s608 + $0x80] sm:$0xff]
            %643 = vst [vmem:[%s609 + $0x80] sm:$0xff] %v642
          $region50: #{tpu_custom_call.1} parent=44 // loop_footer
            %s607 = sadd.s32 1, %s603
          $region51: #{tpu_custom_call.1} parent=44 // loop_footer_branch
            %602 = sbr.rel target = $region47
          $region52: #{tpu_custom_call.1} parent=44 // loop_exit
            _
        $region45: #{tpu_custom_call.1} parent=36 // pred_fallthru
          _
      $region37: #{tpu_custom_call.1} parent=32 // pred_fallthru
        _
      %690 = vnop
    $region33: #{tpu_custom_call.1} parent=1 // pred_fallthru
      _
    // Predicated region
    $region68: #{tpu_custom_call.1} parent=1 // pred_check
      _
    $region69: #{tpu_custom_call.1} parent=1 // pred_check_branch
      %692 = sbr.rel (0) target = $region71
    $region70: #{tpu_custom_call.1} parent=1 // pred_region
      _
    $region71: #{tpu_custom_call.1} parent=1 // pred_fallthru
      _

</llo_original>
